<compile_context>
chip_gen: v7x
topology: tpu7x:2x2x1
jax: 0.10.0
libtpu: 0.0.40
codegen_flags: <defaults>
</compile_context>

<pallas_src>
import functools

import jax
import jax.numpy as jnp
from jax import lax
from jax.experimental import pallas as pl
from jax.experimental.pallas import tpu as pltpu


def _round_up(x, m):
    return ((x + m - 1) // m) * m


def _pick_tile(total, max_tile, unit):
    """Largest multiple of `unit` that divides `total` and is <= max_tile."""
    t = max((min(max_tile, total) // unit) * unit, unit)
    while total % t != 0:
        t -= unit
    return t


def _gelu_exact(x):
    # PyTorch nn.GELU()/F.gelu default is the exact erf-based GELU.
    inv_sqrt2 = jnp.float32(0.7071067811865476)
    return 0.5 * x * (1.0 + lax.erf(x * inv_sqrt2))


def _decoder_kernel(z_ref, w1_ref, b1_ref, wh_ref, bh_ref, w2_ref, b2_ref,
                    out_ref, h_ref, *, depth, apply_sigmoid):
    # z_ref : (TM, NLp) f32        w1_ref: (NLp, WP) bf16   b1_ref: (1, WP) f32
    # wh_ref: (n_hidden, WP, WP) bf16   bh_ref: (n_hidden, 1, WP) f32
    # w2_ref: (WP, TN) bf16        b2_ref: (1, TN) f32
    # out_ref: (TM, TN) f32        h_ref : (TM, WP) bf16 scratch
    j = pl.program_id(1)

    # Hidden stack depends only on the batch tile: compute it once (j == 0) and
    # cache the bf16 activation for the remaining output-column tiles.
    @pl.when(j == 0)
    def _():
        h = jnp.dot(z_ref[...].astype(jnp.bfloat16), w1_ref[...],
                    preferred_element_type=jnp.float32)
        h = _gelu_exact(h + b1_ref[...])
        # hidden_layers: (depth-1) x [Linear(width, width), GELU]
        # NOTE: depth is small here; switch to lax.fori_loop if depth >> 8.
        for l in range(depth - 1):
            h = jnp.dot(h.astype(jnp.bfloat16), wh_ref[l],
                        preferred_element_type=jnp.float32)
            h = _gelu_exact(h + bh_ref[l])
        h_ref[...] = h.astype(jnp.bfloat16)

    y = jnp.dot(h_ref[...], w2_ref[...], preferred_element_type=jnp.float32)
    y = y + b2_ref[...]
    if apply_sigmoid:
        y = jax.nn.sigmoid(y)
    out_ref[...] = y.astype(out_ref.dtype)


def prepare_params(params_f32, *, num_labels, width, output_dim):
    """Pad feature dims to lane-dense sizes once, cast weights to bf16."""
    w1, b1, wh, bh, w2, b2 = params_f32
    nlp = _round_up(num_labels, 8)
    wp = _round_up(width, 128)
    odp = _round_up(output_dim, 128)
    w1p = jnp.pad(w1, ((0, nlp - num_labels), (0, wp - width))).astype(jnp.bfloat16)
    b1p = jnp.pad(b1, ((0, 0), (0, wp - width))).astype(jnp.float32)
    whp = jnp.pad(wh, ((0, 0), (0, wp - width), (0, wp - width))).astype(jnp.bfloat16)
    bhp = jnp.pad(bh, ((0, 0), (0, 0), (0, wp - width))).astype(jnp.float32)
    w2p = jnp.pad(w2, ((0, wp - width), (0, odp - output_dim))).astype(jnp.bfloat16)
    b2p = jnp.pad(b2, ((0, 0), (0, odp - output_dim))).astype(jnp.float32)
    return (w1p, b1p, whp, bhp, w2p, b2p), (nlp, wp, odp)


def image_decoder_forward(z, padded_params, padded_dims, *, num_labels, depth,
                          output_dim, tm=256, tn=512):
    """Fused MLP decoder. z is any shape reshapeable to (-1, num_labels)."""
    w1p, b1p, whp, bhp, w2p, b2p = padded_params
    nlp, wp, odp = padded_dims
    n_hidden = whp.shape[0]

    z2 = z.reshape(-1, num_labels).astype(jnp.float32)
    b = z2.shape[0]
    # Batch tile: multiple of 16 (safe for both f32 and bf16 sublane packing).
    tm_eff = min(tm, _round_up(b, 16))
    bp = _round_up(b, tm_eff)
    tn_eff = _pick_tile(odp, tn, 128)

    z_pad = jnp.pad(z2, ((0, bp - b), (0, nlp - num_labels)))

    grid = (bp // tm_eff, odp // tn_eff)
    kernel = functools.partial(_decoder_kernel, depth=depth,
                               apply_sigmoid=(num_labels > 1))

    out = pl.pallas_call(
        kernel,
        out_shape=jax.ShapeDtypeStruct((bp, odp), jnp.float32),
        grid=grid,
        in_specs=[
            pl.BlockSpec((tm_eff, nlp), lambda i, j: (i, 0)),          # z tile
            pl.BlockSpec((nlp, wp), lambda i, j: (0, 0)),              # w1 (resident)
            pl.BlockSpec((1, wp), lambda i, j: (0, 0)),                # b1
            pl.BlockSpec((n_hidden, wp, wp), lambda i, j: (0, 0, 0)),  # wh (resident)
            pl.BlockSpec((n_hidden, 1, wp), lambda i, j: (0, 0, 0)),   # bh
            pl.BlockSpec((wp, tn_eff), lambda i, j: (0, j)),           # w2 column tile
            pl.BlockSpec((1, tn_eff), lambda i, j: (0, j)),            # b2 column tile
        ],
        out_specs=pl.BlockSpec((tm_eff, tn_eff), lambda i, j: (i, j)),
        scratch_shapes=[pltpu.VMEM((tm_eff, wp), jnp.bfloat16)],       # cached hidden act
        compiler_params=pltpu.CompilerParams(
            dimension_semantics=("parallel", "arbitrary"),
            vmem_limit_bytes=48 * 1024 * 1024),                        # headroom under v7x 64 MiB
    )(z_pad, w1p, b1p, whp, bhp, w2p, b2p)
    return out[:b, :output_dim]


def init_params(key, *, num_labels, width, output_dim, depth):
    """Deterministic synthetic parameters (shapes from image_Decoder.__init__),
    stored transposed vs PyTorch, i.e. (in_features, out_features)."""
    n_hidden = max(depth - 1, 1)
    ks = jax.random.split(key, 6)
    scale_in = 1.0 / jnp.sqrt(jnp.float32(num_labels))
    scale_w = 1.0 / jnp.sqrt(jnp.float32(width))
    w1 = jax.random.normal(ks[0], (num_labels, width), jnp.float32) * scale_in
    b1 = jax.random.normal(ks[1], (1, width), jnp.float32) * 0.01
    wh = jax.random.normal(ks[2], (n_hidden, width, width), jnp.float32) * scale_w
    bh = jax.random.normal(ks[3], (n_hidden, 1, width), jnp.float32) * 0.01
    w2 = jax.random.normal(ks[4], (width, output_dim), jnp.float32) * scale_w
    b2 = jax.random.normal(ks[5], (1, output_dim), jnp.float32) * 0.01
    if depth - 1 == 0:
        # dummy hidden stack (never indexed when depth == 1)
        wh = jnp.zeros((1, width, width), jnp.float32)
        bh = jnp.zeros((1, 1, width), jnp.float32)
    return (w1, b1, wh, bh, w2, b2)


def _reference_forward(z, params, *, num_labels, depth):
    """Pure-JAX reference mirroring the PyTorch forward with the same bf16-matmul /
    f32-accumulate numerics as the kernel."""
    w1, b1, wh, bh, w2, b2 = params
    z2 = z.reshape(-1, num_labels).astype(jnp.float32)

    def mm(a, w):
        return jnp.dot(a.astype(jnp.bfloat16), w.astype(jnp.bfloat16),
                       preferred_element_type=jnp.float32)

    h = _gelu_exact(mm(z2, w1) + b1[0])
    for l in range(depth - 1):
        h = _gelu_exact(mm(h, wh[l]) + bh[l, 0])
    y = mm(h, w2) + b2[0]
    return jax.nn.sigmoid(y) if num_labels > 1 else y


if __name__ == "__main__":
    # Small config consistent with the module's constructor.
    img_size, channels, num_labels, depth, width, height = 8, 2, 4, 3, 32, 8
    output_dim = channels * img_size * height  # 128

    key = jax.random.PRNGKey(0)
    pkey, zkey = jax.random.split(key)
    params = init_params(pkey, num_labels=num_labels, width=width,
                         output_dim=output_dim, depth=depth)
    padded_params, padded_dims = prepare_params(
        params, num_labels=num_labels, width=width, output_dim=output_dim)

    batch = 2
    z = jax.random.normal(zkey, (batch, num_labels), jnp.float32)

    out = image_decoder_forward(z, padded_params, padded_dims,
                                num_labels=num_labels, depth=depth,
                                output_dim=output_dim)
    out = jax.block_until_ready(out)

    ref = _reference_forward(z, params, num_labels=num_labels, depth=depth)
    assert out.shape == (batch, output_dim), out.shape
    err = float(jnp.max(jnp.abs(out - ref)))
    assert err < 2e-3, err
    print("KERNEL_OK")
</pallas_src>

<mosaic_0001>
module attributes {stable_mosaic.version = 11 : i64} {
  func.func @_decoder_kernel(%arg0: i32, %arg1: i32, %arg2: memref<16x8xf32, #tpu.memory_space<vmem>>, %arg3: memref<8x128xbf16, #tpu.memory_space<vmem>>, %arg4: memref<1x128xf32, #tpu.memory_space<vmem>>, %arg5: memref<2x128x128xbf16, #tpu.memory_space<vmem>>, %arg6: memref<2x1x128xf32, #tpu.memory_space<vmem>>, %arg7: memref<128x128xbf16, #tpu.memory_space<vmem>>, %arg8: memref<1x128xf32, #tpu.memory_space<vmem>>, %arg9: memref<16x128xf32, #tpu.memory_space<vmem>>, %arg10: memref<16x128xbf16, #tpu.memory_space<vmem>>) attributes {dimension_semantics = [#tpu.dimension_semantics<parallel>, #tpu.dimension_semantics<arbitrary>], iteration_bounds = array<i64: 1, 1>, scalar_prefetch = 0 : i64, scratch_operands = 1 : i64, tpu.core_type = #tpu.core_type<tc>, window_params = [{transform_indices = @transform_0, window_bounds = array<i64: 16, 8>}, {pipeline_mode = #tpu.pipeline_mode<synchronous>, transform_indices = @transform_1, window_bounds = array<i64: 8, 128>}, {pipeline_mode = #tpu.pipeline_mode<synchronous>, transform_indices = @transform_2, window_bounds = array<i64: 1, 128>}, {pipeline_mode = #tpu.pipeline_mode<synchronous>, transform_indices = @transform_3, window_bounds = array<i64: 2, 128, 128>}, {pipeline_mode = #tpu.pipeline_mode<synchronous>, transform_indices = @transform_4, window_bounds = array<i64: 2, 1, 128>}, {transform_indices = @transform_5, window_bounds = array<i64: 128, 128>}, {transform_indices = @transform_6, window_bounds = array<i64: 1, 128>}, {transform_indices = @transform_7, window_bounds = array<i64: 16, 128>}]} {
    %c0_i32 = arith.constant 0 : i32
    %0 = arith.cmpi eq, %arg1, %c0_i32 : i32
    %1 = arith.extui %0 : i1 to i32
    %c0_i32_0 = arith.constant 0 : i32
    %2 = arith.cmpi ne, %1, %c0_i32_0 : i32
    scf.if %2 {
      %c0_9 = arith.constant 0 : index
      %c0_10 = arith.constant 0 : index
      %15 = vector.load %arg2[%c0_9, %c0_10] : memref<16x8xf32, #tpu.memory_space<vmem>>, vector<16x8xf32>
      %16 = arith.truncf %15 : vector<16x8xf32> to vector<16x8xbf16>
      %c0_11 = arith.constant 0 : index
      %c0_12 = arith.constant 0 : index
      %17 = vector.load %arg3[%c0_11, %c0_12] : memref<8x128xbf16, #tpu.memory_space<vmem>>, vector<8x128xbf16>
      %cst_13 = arith.constant dense<0.000000e+00> : vector<16x128xf32>
      %18 = tpu.matmul %16, %17, %cst_13 {dimension_numbers = #tpu.dot_dimension_numbers<[1], [0], [0], [1], [0, 0, 1, 1], [], []>} : vector<16x8xbf16>, vector<8x128xbf16>, vector<16x128xf32> -> vector<16x128xf32>
      %c0_14 = arith.constant 0 : index
      %c0_15 = arith.constant 0 : index
      %19 = vector.load %arg4[%c0_14, %c0_15] : memref<1x128xf32, #tpu.memory_space<vmem>>, vector<1x128xf32>
      %20 = vector.broadcast %19 : vector<1x128xf32> to vector<16x128xf32>
      %21 = arith.addf %18, %20 : vector<16x128xf32>
      %cst_16 = arith.constant 5.000000e-01 : f32
      %22 = vector.broadcast %cst_16 : f32 to vector<16x128xf32>
      %23 = arith.mulf %22, %21 : vector<16x128xf32>
      %cst_17 = arith.constant 0.707106769 : f32
      %24 = vector.broadcast %cst_17 : f32 to vector<16x128xf32>
      %25 = arith.mulf %21, %24 : vector<16x128xf32>
      %26 = math.erf %25 : vector<16x128xf32>
      %cst_18 = arith.constant 1.000000e+00 : f32
      %27 = vector.broadcast %cst_18 : f32 to vector<16x128xf32>
      %28 = arith.addf %27, %26 : vector<16x128xf32>
      %29 = arith.mulf %23, %28 : vector<16x128xf32>
      %30 = arith.truncf %29 : vector<16x128xf32> to vector<16x128xbf16>
      %c0_19 = arith.constant 0 : index
      %c0_20 = arith.constant 0 : index
      %c0_21 = arith.constant 0 : index
      %31 = vector.load %arg5[%c0_19, %c0_20, %c0_21] : memref<2x128x128xbf16, #tpu.memory_space<vmem>>, vector<1x128x128xbf16>
      %32 = vector.shape_cast %31 : vector<1x128x128xbf16> to vector<128x128xbf16>
      %cst_22 = arith.constant dense<0.000000e+00> : vector<16x128xf32>
      %33 = tpu.matmul %30, %32, %cst_22 {dimension_numbers = #tpu.dot_dimension_numbers<[1], [0], [0], [1], [0, 0, 1, 1], [], []>} : vector<16x128xbf16>, vector<128x128xbf16>, vector<16x128xf32> -> vector<16x128xf32>
      %c0_23 = arith.constant 0 : index
      %c0_24 = arith.constant 0 : index
      %c0_25 = arith.constant 0 : index
      %34 = vector.load %arg6[%c0_23, %c0_24, %c0_25] : memref<2x1x128xf32, #tpu.memory_space<vmem>>, vector<1x1x128xf32>
      %35 = vector.shape_cast %34 : vector<1x1x128xf32> to vector<1x128xf32>
      %36 = vector.broadcast %35 : vector<1x128xf32> to vector<16x128xf32>
      %37 = arith.addf %33, %36 : vector<16x128xf32>
      %cst_26 = arith.constant 5.000000e-01 : f32
      %38 = vector.broadcast %cst_26 : f32 to vector<16x128xf32>
      %39 = arith.mulf %38, %37 : vector<16x128xf32>
      %cst_27 = arith.constant 0.707106769 : f32
      %40 = vector.broadcast %cst_27 : f32 to vector<16x128xf32>
      %41 = arith.mulf %37, %40 : vector<16x128xf32>
      %42 = math.erf %41 : vector<16x128xf32>
      %cst_28 = arith.constant 1.000000e+00 : f32
      %43 = vector.broadcast %cst_28 : f32 to vector<16x128xf32>
      %44 = arith.addf %43, %42 : vector<16x128xf32>
      %45 = arith.mulf %39, %44 : vector<16x128xf32>
      %46 = arith.truncf %45 : vector<16x128xf32> to vector<16x128xbf16>
      %c1 = arith.constant 1 : index
      %c0_29 = arith.constant 0 : index
      %c0_30 = arith.constant 0 : index
      %47 = vector.load %arg5[%c1, %c0_29, %c0_30] : memref<2x128x128xbf16, #tpu.memory_space<vmem>>, vector<1x128x128xbf16>
      %48 = vector.shape_cast %47 : vector<1x128x128xbf16> to vector<128x128xbf16>
      %cst_31 = arith.constant dense<0.000000e+00> : vector<16x128xf32>
      %49 = tpu.matmul %46, %48, %cst_31 {dimension_numbers = #tpu.dot_dimension_numbers<[1], [0], [0], [1], [0, 0, 1, 1], [], []>} : vector<16x128xbf16>, vector<128x128xbf16>, vector<16x128xf32> -> vector<16x128xf32>
      %c1_32 = arith.constant 1 : index
      %c0_33 = arith.constant 0 : index
      %c0_34 = arith.constant 0 : index
      %50 = vector.load %arg6[%c1_32, %c0_33, %c0_34] : memref<2x1x128xf32, #tpu.memory_space<vmem>>, vector<1x1x128xf32>
      %51 = vector.shape_cast %50 : vector<1x1x128xf32> to vector<1x128xf32>
      %52 = vector.broadcast %51 : vector<1x128xf32> to vector<16x128xf32>
      %53 = arith.addf %49, %52 : vector<16x128xf32>
      %cst_35 = arith.constant 5.000000e-01 : f32
      %54 = vector.broadcast %cst_35 : f32 to vector<16x128xf32>
      %55 = arith.mulf %54, %53 : vector<16x128xf32>
      %cst_36 = arith.constant 0.707106769 : f32
      %56 = vector.broadcast %cst_36 : f32 to vector<16x128xf32>
      %57 = arith.mulf %53, %56 : vector<16x128xf32>
      %58 = math.erf %57 : vector<16x128xf32>
      %cst_37 = arith.constant 1.000000e+00 : f32
      %59 = vector.broadcast %cst_37 : f32 to vector<16x128xf32>
      %60 = arith.addf %59, %58 : vector<16x128xf32>
      %61 = arith.mulf %55, %60 : vector<16x128xf32>
      %62 = arith.truncf %61 : vector<16x128xf32> to vector<16x128xbf16>
      %c0_38 = arith.constant 0 : index
      %c0_39 = arith.constant 0 : index
      %63 = vector.load %arg10[%c0_38, %c0_39] : memref<16x128xbf16, #tpu.memory_space<vmem>>, vector<16x128xbf16>
      tpu.vector_store %arg10[%c0_38, %c0_39], %62 {strides = array<i32>} : memref<16x128xbf16, #tpu.memory_space<vmem>>, vector<16x128xbf16>,
    } else {
    }
    %c0 = arith.constant 0 : index
    %c0_1 = arith.constant 0 : index
    %3 = vector.load %arg10[%c0, %c0_1] : memref<16x128xbf16, #tpu.memory_space<vmem>>, vector<16x128xbf16>
    %c0_2 = arith.constant 0 : index
    %c0_3 = arith.constant 0 : index
    %4 = vector.load %arg7[%c0_2, %c0_3] : memref<128x128xbf16, #tpu.memory_space<vmem>>, vector<128x128xbf16>
    %cst = arith.constant dense<0.000000e+00> : vector<16x128xf32>
    %5 = tpu.matmul %3, %4, %cst {dimension_numbers = #tpu.dot_dimension_numbers<[1], [0], [0], [1], [0, 0, 1, 1], [], []>} : vector<16x128xbf16>, vector<128x128xbf16>, vector<16x128xf32> -> vector<16x128xf32>
    %c0_4 = arith.constant 0 : index
    %c0_5 = arith.constant 0 : index
    %6 = vector.load %arg8[%c0_4, %c0_5] : memref<1x128xf32, #tpu.memory_space<vmem>>, vector<1x128xf32>
    %7 = vector.broadcast %6 : vector<1x128xf32> to vector<16x128xf32>
    %8 = arith.addf %5, %7 : vector<16x128xf32>
    %9 = arith.negf %8 : vector<16x128xf32>
    %10 = math.exp %9 : vector<16x128xf32>
    %cst_6 = arith.constant 1.000000e+00 : f32
    %11 = vector.broadcast %cst_6 : f32 to vector<16x128xf32>
    %12 = arith.addf %11, %10 : vector<16x128xf32>
    %13 = arith.divf %11, %12 : vector<16x128xf32>
    %c0_7 = arith.constant 0 : index
    %c0_8 = arith.constant 0 : index
    %14 = vector.load %arg9[%c0_7, %c0_8] : memref<16x128xf32, #tpu.memory_space<vmem>>, vector<16x128xf32>
    tpu.vector_store %arg9[%c0_7, %c0_8], %13 {strides = array<i32>} : memref<16x128xf32, #tpu.memory_space<vmem>>, vector<16x128xf32>,
    return
  }
  func.func @transform_0(%arg0: i32, %arg1: i32) -> (i32, i32) {
    %c0_i32 = arith.constant 0 : i32
    %c0_i32_0 = arith.constant 0 : i32
    return %arg0, %c0_i32 : i32, i32
  }
  func.func @transform_1(%arg0: i32, %arg1: i32) -> (i32, i32) {
    %c0_i32 = arith.constant 0 : i32
    %c0_i32_0 = arith.constant 0 : i32
    %c0_i32_1 = arith.constant 0 : i32
    return %c0_i32, %c0_i32_0 : i32, i32
  }
  func.func @transform_2(%arg0: i32, %arg1: i32) -> (i32, i32) {
    %c0_i32 = arith.constant 0 : i32
    %c0_i32_0 = arith.constant 0 : i32
    %c0_i32_1 = arith.constant 0 : i32
    return %c0_i32, %c0_i32_0 : i32, i32
  }
  func.func @transform_3(%arg0: i32, %arg1: i32) -> (i32, i32, i32) {
    %c0_i32 = arith.constant 0 : i32
    %c0_i32_0 = arith.constant 0 : i32
    %c0_i32_1 = arith.constant 0 : i32
    %c0_i32_2 = arith.constant 0 : i32
    return %c0_i32, %c0_i32_0, %c0_i32_1 : i32, i32, i32
  }
  func.func @transform_4(%arg0: i32, %arg1: i32) -> (i32, i32, i32) {
    %c0_i32 = arith.constant 0 : i32
    %c0_i32_0 = arith.constant 0 : i32
    %c0_i32_1 = arith.constant 0 : i32
    %c0_i32_2 = arith.constant 0 : i32
    return %c0_i32, %c0_i32_0, %c0_i32_1 : i32, i32, i32
  }
  func.func @transform_5(%arg0: i32, %arg1: i32) -> (i32, i32) {
    %c0_i32 = arith.constant 0 : i32
    %c0_i32_0 = arith.constant 0 : i32
    return %c0_i32, %arg1 : i32, i32
  }
  func.func @transform_6(%arg0: i32, %arg1: i32) -> (i32, i32) {
    %c0_i32 = arith.constant 0 : i32
    %c0_i32_0 = arith.constant 0 : i32
    return %c0_i32, %arg1 : i32, i32
  }
  func.func @transform_7(%arg0: i32, %arg1: i32) -> (i32, i32) {
    %c0_i32 = arith.constant 0 : i32
    return %arg0, %arg1 : i32, i32
  }
}

</mosaic_0001>

<llo_original>
// kernel: tpu_custom_call.1
$region0: #{tpu_custom_call.1}
  #allocation0 [shape = 'u32[]', space=smem, size = 0x4, offset = 0x4, fixed_abs, tag = 'smem constant byte address 0x4 - core index']
  #allocation1 [shape = 'u32[144,128]{1,0:T(1,128)}', space=vmem, size = 0x12000, scoped, tag = 'internal scratch']
  #allocation2 [shape = 'bf16[16,128]{1,0:T(16,128)(2,1)}', space=vmem, size = 0x1000, scoped, tag = 'scratch operand']
  %s0 = inlined_call_operand.vmem [shape: f32[16,8], index: 0, kind: input, shape index: {}]
  %s1 = inlined_call_operand.vmem [shape: bf16[8,128], index: 1, kind: input, shape index: {}]
  %s2 = inlined_call_operand.vmem [shape: f32[1,128], index: 2, kind: input, shape index: {}]
  %s3 = inlined_call_operand.hbm [shape: bf16[2,128,128], index: 3, kind: input, shape index: {}]
  %s4 = inlined_call_operand.vmem [shape: f32[2,1,128], index: 4, kind: input, shape index: {}]
  %s5 = inlined_call_operand.hbm [shape: bf16[128,128], index: 5, kind: input, shape index: {}]
  %s6 = inlined_call_operand.vmem [shape: f32[1,128], index: 6, kind: input, shape index: {}]
  %s7 = inlined_call_operand.hbm [shape: f32[16,128], index: 7, kind: output, shape index: {}]
  %s8 = sld [smem:[#allocation0]]
  $region50: #{tpu_custom_call.1} parent=0
    _
  %s10 = ssub.s32 1, %s8
  %s11 = scalar_select 0, %s10, %s8
  $region1: #{tpu_custom_call.1} parent=0
    #allocation3 [shape = 'u8[65536]{0}', space=vmem, size = 0x10000, scoped, tag = 'input window, operand 3, single buffered']
    #allocation4 [shape = 's32[1]{0}', space=sflag, size = 0x4, scoped, tag = 'scoped memory for tpu_custom_call.1']
    #allocation5 [shape = 's32[1]{0}', space=sflag, size = 0x4, scoped, tag = 'scoped memory for tpu_custom_call.1']
    #allocation6 [shape = 'u8[32768]{0}', space=vmem, size = 0x8000, scoped, tag = 'input window, operand 5, single buffered']
    #allocation7 [shape = 's32[1]{0}', space=sflag, size = 0x4, scoped, tag = 'scoped memory for tpu_custom_call.1']
    #allocation8 [shape = 'u8[8192]{0}', space=vmem, size = 0x2000, scoped, tag = 'output window, operand 0, single buffered']
    %12 = vsyncpa [#allocation4], 0
    %13 = vsyncpa [#allocation7], 0
    %14 = vsyncpa [#allocation5], 0
    // Predicated region
    $region2: #{tpu_custom_call.1} parent=1 // pred_check
      _
    $region3: #{tpu_custom_call.1} parent=1 // pred_check_branch
      %16 = sbr.rel (0) target = $region5
    $region4: #{tpu_custom_call.1} parent=1 // pred_region
      _
    $region5: #{tpu_custom_call.1} parent=1 // pred_fallthru
      _
    // Predicated region
    $region6: #{tpu_custom_call.1} parent=1 // pred_check
      _
    $region7: #{tpu_custom_call.1} parent=1 // pred_check_branch
      %18 = sbr.rel (0) target = $region9
    $region8: #{tpu_custom_call.1} parent=1 // pred_region
      _
    $region9: #{tpu_custom_call.1} parent=1 // pred_fallthru
      _
    // Predicated region
    $region10: #{tpu_custom_call.1} parent=1 // pred_check
      _
    $region11: #{tpu_custom_call.1} parent=1 // pred_check_branch
      %20 = sbr.rel (0) target = $region13
    $region12: #{tpu_custom_call.1} parent=1 // pred_region
      _
    $region13: #{tpu_custom_call.1} parent=1 // pred_fallthru
      _
    // Predicated region
    $region14: #{tpu_custom_call.1} parent=1 // pred_check
      _
    $region15: #{tpu_custom_call.1} parent=1 // pred_check_branch
      %22 = sbr.rel (0) target = $region17
    $region16: #{tpu_custom_call.1} parent=1 // pred_region
      %s24 = ssub.s32 2048, 2048
      %25 = vsyncadd [#allocation4], %s24
      %s26 = sshll.u32 [#allocation3], 4
      %s27 = int_to_ptr.vmem [resolvable:$true] %s26
      %32 = dma.hbm_to_vmem [thread:$0]  %s3, 2048, %s27, [#allocation4], 64, 64, 4
    $region17: #{tpu_custom_call.1} parent=1 // pred_fallthru
      _
    // Predicated region
    $region18: #{tpu_custom_call.1} parent=1 // pred_check
      _
    $region19: #{tpu_custom_call.1} parent=1 // pred_check_branch
      %34 = sbr.rel (0) target = $region21
    $region20: #{tpu_custom_call.1} parent=1 // pred_region
      _
    $region21: #{tpu_custom_call.1} parent=1 // pred_fallthru
      _
    // Predicated region
    $region22: #{tpu_custom_call.1} parent=1 // pred_check
      _
    $region23: #{tpu_custom_call.1} parent=1 // pred_check_branch
      %36 = sbr.rel (0) target = $region25
    $region24: #{tpu_custom_call.1} parent=1 // pred_region
      %s38 = ssub.s32 1024, 1024
      %39 = vsyncadd [#allocation7], %s38
      %s40 = sshll.u32 [#allocation6], 4
      %s41 = int_to_ptr.vmem [resolvable:$true] %s40
      %46 = dma.hbm_to_vmem [thread:$0]  %s5, 1024, %s41, [#allocation7], 64, 64, 4
    $region25: #{tpu_custom_call.1} parent=1 // pred_fallthru
      _
    // Predicated region
    $region26: #{tpu_custom_call.1} parent=1 // pred_check
      _
    $region27: #{tpu_custom_call.1} parent=1 // pred_check_branch
      %48 = sbr.rel (0) target = $region29
    $region28: #{tpu_custom_call.1} parent=1 // pred_region
      _
    $region29: #{tpu_custom_call.1} parent=1 // pred_fallthru
      _
    // Predicated region
    $region30: #{tpu_custom_call.1} parent=1 // pred_check
      _
    $region31: #{tpu_custom_call.1} parent=1 // pred_check_branch
      %50 = sbr.rel (0) target = $region33
    $region32: #{tpu_custom_call.1} parent=1 // pred_region
      %51 = dma.done [#allocation4], 2048
    $region33: #{tpu_custom_call.1} parent=1 // pred_fallthru
      _
    // Predicated region
    $region34: #{tpu_custom_call.1} parent=1 // pred_check
      _
    $region35: #{tpu_custom_call.1} parent=1 // pred_check_branch
      %53 = sbr.rel (0) target = $region37
    $region36: #{tpu_custom_call.1} parent=1 // pred_region
      %54 = dma.done [#allocation7], 1024
    $region37: #{tpu_custom_call.1} parent=1 // pred_fallthru
      _
    %p56 = scmp.eq.s32.totalorder 0, 0
    // Predicated region
    $region38: #{tpu_custom_call.1} parent=1 // pred_check
      %p57 = pneg %p56
    $region39: #{tpu_custom_call.1} parent=1 // pred_check_branch
      %59 = sbr.rel (%p57) target = $region41
    $region40: #{tpu_custom_call.1} parent=1 // pred_region
      %v60 = vld [vmem:[%s0] sm:$0xff]
      %v61 = vld [vmem:[%s0 + $0x8] sm:$0xff]
      %v62 = vpack.c.bf16 %v61, %v60
      %v63 = vld [vmem:[%s1] sm:$0xf]
      %v64 = vld [vmem:[%s2] sm:$0x1]
      %v66 = vlaneseq
      %v67 = vshrl.u32 %v66, 7
      %v68 = vsub.s32 0, %v67
      %v69 = vrot.slane %v64, %v68
      %vm71 = vcmask 64512
      %v73 = vsel %vm71, %v62, 0
      %vm75 = vcmask 1043456
      %v77 = vsel %vm75, %v63, 0
      %79 = vmatprep.subr.bf16.mxu0 0
      %80 = vmatpush1.bf16.msra.mxu0 %v77
      %81 = vmatprep.subr.bf16.mxu0 0
      %82 = vmatpush1.bf16.msra.mxu0 0
      %83 = vmatprep.subr.bf16.mxu0 0
      %84 = vmatpush1.bf16.msra.mxu0 0
      %85 = vmatprep.subr.bf16.mxu0 0
      %86 = vmatpush1.bf16.msra.mxu0 0
      %87 = vmatprep.subr.bf16.mxu0 0
      %88 = vmatpush1.bf16.msra.mxu0 0
      %89 = vmatprep.subr.bf16.mxu0 0
      %90 = vmatpush1.bf16.msra.mxu0 0
      %91 = vmatprep.subr.bf16.mxu0 0
      %92 = vmatpush1.bf16.msra.mxu0 0
      %93 = vmatprep.subr.bf16.mxu0 0
      %94 = vmatpush1.bf16.msra.mxu0 0
      %95 = vmatprep.subr.bf16.mxu0 0
      %96 = vmatpush1.bf16.msra.mxu0 0
      %97 = vmatprep.subr.bf16.mxu0 0
      %98 = vmatpush1.bf16.msra.mxu0 0
      %99 = vmatprep.subr.bf16.mxu0 0
      %100 = vmatpush1.bf16.msra.mxu0 0
      %101 = vmatprep.subr.bf16.mxu0 0
      %102 = vmatpush1.bf16.msra.mxu0 0
      %103 = vmatprep.subr.bf16.mxu0 0
      %104 = vmatpush1.bf16.msra.mxu0 0
      %105 = vmatprep.subr.bf16.mxu0 0
      %106 = vmatpush1.bf16.msra.mxu0 0
      %107 = vmatprep.subr.bf16.mxu0 0
      %108 = vmatpush1.bf16.msra.mxu0 0
      %109 = vmatprep.subr.bf16.mxu0 0
      %110 = vmatpush1.bf16.msra.mxu0 0
      %111 = vmatprep.mubr.bf16.mxu0 0
      %112 = vmatmul.mubr.bf16.gmra.mrb[0].mxu0 %v73
      %v113 = vpop.f32.mrb[0].mxu0
      %v114 = vadd.f32 %v69, %v113
      %v115 = vpop.f32.mrb[0].mxu0
      %v116 = vpop.f32.mrb[0].mxu0
      %v117 = vadd.f32 %v69, %v116
      %v118 = vpop.f32.mrb[0].mxu0
      %119 = vdwg.mxu0
      %v120 = vmul.f32 %v114, 0.5
      %v121 = vmul.f32 %v117, 0.5
      %v122 = vmul.f32 %v114, 0.70710677
      %v123 = vmul.f32 %v117, 0.70710677
      %v124 = verf.f32.pop %v122
      %v125 = verf.f32.pop %v123
      %v126 = vadd.f32 %v124, 1.0
      %v127 = vadd.f32 %v125, 1.0
      %v128 = vmul.f32 %v120, %v126
      %v129 = vmul.f32 %v121, %v127
      %v130 = vpack.c.bf16 %v129, %v128
      %v131 = vld [vmem:[#allocation3] sm:$0xf]
      %v132 = vld [vmem:[#allocation3 + $0x4] sm:$0xf]
      %v133 = vld [vmem:[#allocation3 + $0x8] sm:$0xf]
      %v134 = vld [vmem:[#allocation3 + $0xc] sm:$0xf]
      %v135 = vld [vmem:[#allocation3 + $0x10] sm:$0xf]
      %v136 = vld [vmem:[#allocation3 + $0x14] sm:$0xf]
      %v137 = vld [vmem:[#allocation3 + $0x18] sm:$0xf]
      %v138 = vld [vmem:[#allocation3 + $0x1c] sm:$0xf]
      %v139 = vld [vmem:[#allocation3 + $0x20] sm:$0xf]
      %v140 = vld [vmem:[#allocation3 + $0x24] sm:$0xf]
      %v141 = vld [vmem:[#allocation3 + $0x28] sm:$0xf]
      %v142 = vld [vmem:[#allocation3 + $0x2c] sm:$0xf]
      %v143 = vld [vmem:[#allocation3 + $0x30] sm:$0xf]
      %v144 = vld [vmem:[#allocation3 + $0x34] sm:$0xf]
      %v145 = vld [vmem:[#allocation3 + $0x38] sm:$0xf]
      %v146 = vld [vmem:[#allocation3 + $0x3c] sm:$0xf]
      %v147 = vld [vmem:[%s4] sm:$0x1]
      %v149 = vlaneseq
      %v150 = vshrl.u32 %v149, 7
      %v151 = vsub.s32 0, %v150
      %v152 = vrot.slane %v147, %v151
      %v170 = vunpack.c.l.b16 %v131
      %v171 = vunpack.c.l.b16 %v132
      %v172 = vunpack.c.l.b16 %v133
      %v173 = vunpack.c.l.b16 %v134
      %v174 = vunpack.c.l.b16 %v135
      %v175 = vunpack.c.l.b16 %v136
      %v176 = vunpack.c.l.b16 %v137
      %v177 = vunpack.c.l.b16 %v138
      %v178 = vunpack.c.l.b16 %v139
      %v179 = vunpack.c.l.b16 %v140
      %v180 = vunpack.c.l.b16 %v141
      %v181 = vunpack.c.l.b16 %v142
      %v182 = vunpack.c.l.b16 %v143
      %v183 = vunpack.c.l.b16 %v144
      %v184 = vunpack.c.l.b16 %v145
      %v185 = vunpack.c.l.b16 %v146
      %v186 = vpack.c.b16 %v171, %v170
      %v187 = vpack.c.b16 %v173, %v172
      %v188 = vpack.c.b16 %v175, %v174
      %v189 = vpack.c.b16 %v177, %v176
      %v190 = vpack.c.b16 %v179, %v178
      %v191 = vpack.c.b16 %v181, %v180
      %v192 = vpack.c.b16 %v183, %v182
      %v193 = vpack.c.b16 %v185, %v184
      %202 = vmatprep.subr.bf16.mxu0 0
      %203 = vmatpush1.bf16.msra.mxu0 %v186
      %204 = vmatprep.subr.bf16.mxu0 0
      %205 = vmatpush1.bf16.msra.mxu0 %v187
      %206 = vmatprep.subr.bf16.mxu0 0
      %207 = vmatpush1.bf16.msra.mxu0 %v188
      %208 = vmatprep.subr.bf16.mxu0 0
      %209 = vmatpush1.bf16.msra.mxu0 %v189
      %210 = vmatprep.subr.bf16.mxu0 0
      %211 = vmatpush1.bf16.msra.mxu0 %v190
      %212 = vmatprep.subr.bf16.mxu0 0
      %213 = vmatpush1.bf16.msra.mxu0 %v191
      %214 = vmatprep.subr.bf16.mxu0 0
      %215 = vmatpush1.bf16.msra.mxu0 %v192
      %216 = vmatprep.subr.bf16.mxu0 0
      %217 = vmatpush1.bf16.msra.mxu0 %v193
      %218 = vmatprep.subr.bf16.mxu0 0
      %219 = vmatpush1.bf16.msra.mxu0 0
      %220 = vmatprep.subr.bf16.mxu0 0
      %221 = vmatpush1.bf16.msra.mxu0 0
      %222 = vmatprep.subr.bf16.mxu0 0
      %223 = vmatpush1.bf16.msra.mxu0 0
      %224 = vmatprep.subr.bf16.mxu0 0
      %225 = vmatpush1.bf16.msra.mxu0 0
      %226 = vmatprep.subr.bf16.mxu0 0
      %227 = vmatpush1.bf16.msra.mxu0 0
      %228 = vmatprep.subr.bf16.mxu0 0
      %229 = vmatpush1.bf16.msra.mxu0 0
      %230 = vmatprep.subr.bf16.mxu0 0
      %231 = vmatpush1.bf16.msra.mxu0 0
      %232 = vmatprep.subr.bf16.mxu0 0
      %233 = vmatpush1.bf16.msra.mxu0 0
      %234 = vmatprep.mubr.bf16.mxu0 0
      %235 = vmatmul.mubr.bf16.gmra.mrb[0].mxu0 %v130
      %v236 = vpop.f32.mrb[0].mxu0
      %v237 = vadd.f32 %v152, %v236
      %v238 = vpop.f32.mrb[0].mxu0
      %v239 = vpop.f32.mrb[0].mxu0
      %v240 = vadd.f32 %v152, %v239
      %v241 = vpop.f32.mrb[0].mxu0
      %242 = vdwg.mxu0
      %v243 = vmul.f32 %v237, 0.5
      %v244 = vmul.f32 %v240, 0.5
      %v245 = vmul.f32 %v237, 0.70710677
      %v246 = vmul.f32 %v240, 0.70710677
      %v247 = verf.f32.pop %v245
      %v248 = verf.f32.pop %v246
      %v249 = vadd.f32 %v247, 1.0
      %v250 = vadd.f32 %v248, 1.0
      %v251 = vmul.f32 %v243, %v249
      %v252 = vmul.f32 %v244, %v250
      %v253 = vpack.c.bf16 %v252, %v251
      %s254 = scalar_lea.vmem [#allocation3], 64
      %v255 = vld [vmem:[%s254] sm:$0xf]
      %v256 = vld [vmem:[%s254 + $0x4] sm:$0xf]
      %v257 = vld [vmem:[%s254 + $0x8] sm:$0xf]
      %v258 = vld [vmem:[%s254 + $0xc] sm:$0xf]
      %v259 = vld [vmem:[%s254 + $0x10] sm:$0xf]
      %v260 = vld [vmem:[%s254 + $0x14] sm:$0xf]
      %v261 = vld [vmem:[%s254 + $0x18] sm:$0xf]
      %v262 = vld [vmem:[%s254 + $0x1c] sm:$0xf]
      %v263 = vld [vmem:[%s254 + $0x20] sm:$0xf]
      %v264 = vld [vmem:[%s254 + $0x24] sm:$0xf]
      %v265 = vld [vmem:[%s254 + $0x28] sm:$0xf]
      %v266 = vld [vmem:[%s254 + $0x2c] sm:$0xf]
      %v267 = vld [vmem:[%s254 + $0x30] sm:$0xf]
      %v268 = vld [vmem:[%s254 + $0x34] sm:$0xf]
      %v269 = vld [vmem:[%s254 + $0x38] sm:$0xf]
      %v270 = vld [vmem:[%s254 + $0x3c] sm:$0xf]
      %s271 = scalar_lea.vmem %s4, 1
      %v272 = vld [vmem:[%s271] sm:$0x1]
      %v274 = vlaneseq
      %v275 = vshrl.u32 %v274, 7
      %v276 = vsub.s32 0, %v275
      %v277 = vrot.slane %v272, %v276
      %v295 = vunpack.c.l.b16 %v255
      %v296 = vunpack.c.l.b16 %v256
      %v297 = vunpack.c.l.b16 %v257
      %v298 = vunpack.c.l.b16 %v258
      %v299 = vunpack.c.l.b16 %v259
      %v300 = vunpack.c.l.b16 %v260
      %v301 = vunpack.c.l.b16 %v261
      %v302 = vunpack.c.l.b16 %v262
      %v303 = vunpack.c.l.b16 %v263
      %v304 = vunpack.c.l.b16 %v264
      %v305 = vunpack.c.l.b16 %v265
      %v306 = vunpack.c.l.b16 %v266
      %v307 = vunpack.c.l.b16 %v267
      %v308 = vunpack.c.l.b16 %v268
      %v309 = vunpack.c.l.b16 %v269
      %v310 = vunpack.c.l.b16 %v270
      %v311 = vpack.c.b16 %v296, %v295
      %v312 = vpack.c.b16 %v298, %v297
      %v313 = vpack.c.b16 %v300, %v299
      %v314 = vpack.c.b16 %v302, %v301
      %v315 = vpack.c.b16 %v304, %v303
      %v316 = vpack.c.b16 %v306, %v305
      %v317 = vpack.c.b16 %v308, %v307
      %v318 = vpack.c.b16 %v310, %v309
      %327 = vmatprep.subr.bf16.mxu0 0
      %328 = vmatpush1.bf16.msra.mxu0 %v311
      %329 = vmatprep.subr.bf16.mxu0 0
      %330 = vmatpush1.bf16.msra.mxu0 %v312
      %331 = vmatprep.subr.bf16.mxu0 0
      %332 = vmatpush1.bf16.msra.mxu0 %v313
      %333 = vmatprep.subr.bf16.mxu0 0
      %334 = vmatpush1.bf16.msra.mxu0 %v314
      %335 = vmatprep.subr.bf16.mxu0 0
      %336 = vmatpush1.bf16.msra.mxu0 %v315
      %337 = vmatprep.subr.bf16.mxu0 0
      %338 = vmatpush1.bf16.msra.mxu0 %v316
      %339 = vmatprep.subr.bf16.mxu0 0
      %340 = vmatpush1.bf16.msra.mxu0 %v317
      %341 = vmatprep.subr.bf16.mxu0 0
      %342 = vmatpush1.bf16.msra.mxu0 %v318
      %343 = vmatprep.subr.bf16.mxu0 0
      %344 = vmatpush1.bf16.msra.mxu0 0
      %345 = vmatprep.subr.bf16.mxu0 0
      %346 = vmatpush1.bf16.msra.mxu0 0
      %347 = vmatprep.subr.bf16.mxu0 0
      %348 = vmatpush1.bf16.msra.mxu0 0
      %349 = vmatprep.subr.bf16.mxu0 0
      %350 = vmatpush1.bf16.msra.mxu0 0
      %351 = vmatprep.subr.bf16.mxu0 0
      %352 = vmatpush1.bf16.msra.mxu0 0
      %353 = vmatprep.subr.bf16.mxu0 0
      %354 = vmatpush1.bf16.msra.mxu0 0
      %355 = vmatprep.subr.bf16.mxu0 0
      %356 = vmatpush1.bf16.msra.mxu0 0
      %357 = vmatprep.subr.bf16.mxu0 0
      %358 = vmatpush1.bf16.msra.mxu0 0
      %359 = vmatprep.mubr.bf16.mxu0 0
      %360 = vmatmul.mubr.bf16.gmra.mrb[0].mxu0 %v253
      %v361 = vpop.f32.mrb[0].mxu0
      %v362 = vadd.f32 %v277, %v361
      %v363 = vpop.f32.mrb[0].mxu0
      %v364 = vpop.f32.mrb[0].mxu0
      %v365 = vadd.f32 %v277, %v364
      %v366 = vpop.f32.mrb[0].mxu0
      %367 = vdwg.mxu0
      %v368 = vmul.f32 %v362, 0.5
      %v369 = vmul.f32 %v365, 0.5
      %v370 = vmul.f32 %v362, 0.70710677
      %v371 = vmul.f32 %v365, 0.70710677
      %v372 = verf.f32.pop %v370
      %v373 = verf.f32.pop %v371
      %v374 = vadd.f32 %v372, 1.0
      %v375 = vadd.f32 %v373, 1.0
      %v376 = vmul.f32 %v368, %v374
      %v377 = vmul.f32 %v369, %v375
      %v378 = vpack.c.bf16 %v377, %v376
      %379 = vst [vmem:[#allocation2] sm:$0xff] %v378
    $region41: #{tpu_custom_call.1} parent=1 // pred_fallthru
      _
    %v380 = vld [vmem:[#allocation2] sm:$0xff]
    %v381 = vld [vmem:[#allocation6] sm:$0xf]
    %v382 = vld [vmem:[#allocation6 + $0x4] sm:$0xf]
    %v383 = vld [vmem:[#allocation6 + $0x8] sm:$0xf]
    %v384 = vld [vmem:[#allocation6 + $0xc] sm:$0xf]
    %v385 = vld [vmem:[#allocation6 + $0x10] sm:$0xf]
    %v386 = vld [vmem:[#allocation6 + $0x14] sm:$0xf]
    %v387 = vld [vmem:[#allocation6 + $0x18] sm:$0xf]
    %v388 = vld [vmem:[#allocation6 + $0x1c] sm:$0xf]
    %v389 = vld [vmem:[#allocation6 + $0x20] sm:$0xf]
    %v390 = vld [vmem:[#allocation6 + $0x24] sm:$0xf]
    %v391 = vld [vmem:[#allocation6 + $0x28] sm:$0xf]
    %v392 = vld [vmem:[#allocation6 + $0x2c] sm:$0xf]
    %v393 = vld [vmem:[#allocation6 + $0x30] sm:$0xf]
    %v394 = vld [vmem:[#allocation6 + $0x34] sm:$0xf]
    %v395 = vld [vmem:[#allocation6 + $0x38] sm:$0xf]
    %v396 = vld [vmem:[#allocation6 + $0x3c] sm:$0xf]
    %v397 = vld [vmem:[%s6] sm:$0x1]
    %v399 = vlaneseq
    %v400 = vshrl.u32 %v399, 7
    %v401 = vsub.s32 0, %v400
    %v402 = vrot.slane %v397, %v401
    %v420 = vunpack.c.l.b16 %v381
    %v421 = vunpack.c.l.b16 %v382
    %v422 = vunpack.c.l.b16 %v383
    %v423 = vunpack.c.l.b16 %v384
    %v424 = vunpack.c.l.b16 %v385
    %v425 = vunpack.c.l.b16 %v386
    %v426 = vunpack.c.l.b16 %v387
    %v427 = vunpack.c.l.b16 %v388
    %v428 = vunpack.c.l.b16 %v389
    %v429 = vunpack.c.l.b16 %v390
    %v430 = vunpack.c.l.b16 %v391
    %v431 = vunpack.c.l.b16 %v392
    %v432 = vunpack.c.l.b16 %v393
    %v433 = vunpack.c.l.b16 %v394
    %v434 = vunpack.c.l.b16 %v395
    %v435 = vunpack.c.l.b16 %v396
    %v436 = vpack.c.b16 %v421, %v420
    %v437 = vpack.c.b16 %v423, %v422
    %v438 = vpack.c.b16 %v425, %v424
    %v439 = vpack.c.b16 %v427, %v426
    %v440 = vpack.c.b16 %v429, %v428
    %v441 = vpack.c.b16 %v431, %v430
    %v442 = vpack.c.b16 %v433, %v432
    %v443 = vpack.c.b16 %v435, %v434
    %452 = vmatprep.subr.bf16.mxu0 0
    %453 = vmatpush1.bf16.msra.mxu0 %v436
    %454 = vmatprep.subr.bf16.mxu0 0
    %455 = vmatpush1.bf16.msra.mxu0 %v437
    %456 = vmatprep.subr.bf16.mxu0 0
    %457 = vmatpush1.bf16.msra.mxu0 %v438
    %458 = vmatprep.subr.bf16.mxu0 0
    %459 = vmatpush1.bf16.msra.mxu0 %v439
    %460 = vmatprep.subr.bf16.mxu0 0
    %461 = vmatpush1.bf16.msra.mxu0 %v440
    %462 = vmatprep.subr.bf16.mxu0 0
    %463 = vmatpush1.bf16.msra.mxu0 %v441
    %464 = vmatprep.subr.bf16.mxu0 0
    %465 = vmatpush1.bf16.msra.mxu0 %v442
    %466 = vmatprep.subr.bf16.mxu0 0
    %467 = vmatpush1.bf16.msra.mxu0 %v443
    %468 = vmatprep.subr.bf16.mxu0 0
    %469 = vmatpush1.bf16.msra.mxu0 0
    %470 = vmatprep.subr.bf16.mxu0 0
    %471 = vmatpush1.bf16.msra.mxu0 0
    %472 = vmatprep.subr.bf16.mxu0 0
    %473 = vmatpush1.bf16.msra.mxu0 0
    %474 = vmatprep.subr.bf16.mxu0 0
    %475 = vmatpush1.bf16.msra.mxu0 0
    %476 = vmatprep.subr.bf16.mxu0 0
    %477 = vmatpush1.bf16.msra.mxu0 0
    %478 = vmatprep.subr.bf16.mxu0 0
    %479 = vmatpush1.bf16.msra.mxu0 0
    %480 = vmatprep.subr.bf16.mxu0 0
    %481 = vmatpush1.bf16.msra.mxu0 0
    %482 = vmatprep.subr.bf16.mxu0 0
    %483 = vmatpush1.bf16.msra.mxu0 0
    %484 = vmatprep.mubr.bf16.mxu0 0
    %485 = vmatmul.mubr.bf16.gmra.mrb[0].mxu0 %v380
    %v486 = vpop.f32.mrb[0].mxu0
    %v487 = vadd.f32 %v402, %v486
    %v488 = vpop.f32.mrb[0].mxu0
    %v489 = vpop.f32.mrb[0].mxu0
    %v490 = vadd.f32 %v402, %v489
    %v491 = vpop.f32.mrb[0].mxu0
    %492 = vdwg.mxu0
    %v493 = vxor.u32 %v487, 2147483648
    %v494 = vxor.u32 %v490, 2147483648
    %v495 = vmul.f32 %v493, 1.442695
    %v496 = vpow.pop %v495
    %v497 = vmul.f32 %v494, 1.442695
    %v498 = vpow.pop %v497
    %v499 = vadd.f32 %v496, 1.0
    %v500 = vadd.f32 %v498, 1.0
    %v501 = vrcp.pop %v499
    %v502 = vmul.f32 1.0, %v501
    %v503 = vrcp.pop %v500
    %v504 = vmul.f32 1.0, %v503
    %505 = vst [vmem:[#allocation8] sm:$0xff] %v502
    %506 = vst [vmem:[#allocation8 + $0x8] sm:$0xff] %v504
    // Predicated region
    $region42: #{tpu_custom_call.1} parent=1 // pred_check
      _
    $region43: #{tpu_custom_call.1} parent=1 // pred_check_branch
      %508 = sbr.rel (0) target = $region45
    $region44: #{tpu_custom_call.1} parent=1 // pred_region
      %s510 = ssub.s32 256, 256
      %511 = vsyncadd [#allocation5], %s510
      %s512 = sshll.u32 [#allocation8], 4
      %s513 = int_to_ptr.vmem [resolvable:$true] %s512
      %518 = dma.vmem_to_hbm [thread:$0]  %s513, 256, %s7, [#allocation5], 128, 128, 8
    $region45: #{tpu_custom_call.1} parent=1 // pred_fallthru
      _
    // Predicated region
    $region46: #{tpu_custom_call.1} parent=1 // pred_check
      _
    $region47: #{tpu_custom_call.1} parent=1 // pred_check_branch
      %520 = sbr.rel (0) target = $region49
    $region48: #{tpu_custom_call.1} parent=1 // pred_region
      %521 = dma.done [#allocation5], 256
    $region49: #{tpu_custom_call.1} parent=1 // pred_fallthru
      _
    %522 = vsyncpa [#allocation4], 1
    %523 = vsyncpa [#allocation7], 1
    %524 = vsyncpa [#allocation5], 1

</llo_original>
